<compile_context>
chip_gen: v7x
topology: tpu7x:2x2x1
jax: 0.10.0
libtpu: 0.0.40
codegen_flags: <defaults>
</compile_context>

<pallas_src>
import jax
import jax.numpy as jnp
from jax.experimental import pallas as pl
from jax.experimental.pallas import tpu as pltpu

_MiB = 1024 * 1024


def _logreg_kernel(x_ref, w_ref, b_ref, o_ref):
    # x_ref: (TM, P) VMEM batch tile (auto-pipelined over the grid)
    # w_ref: (1, P)  VMEM, resident across grid steps (index_map -> (0, 0))
    # b_ref: (1, 1)  SMEM scalar bias
    # o_ref: (1, TM) VMEM lane-dense output row
    #
    # Contract P with P (both operands K-last): the big x tile is consumed by the
    # MXU untransposed (same pattern as flash-attention q.k^T), so no vxpose of
    # the multi-MiB tile is emitted.
    logits = jax.lax.dot_general(
        w_ref[...],                                   # (1, P)
        x_ref[...],                                   # (TM, P)
        dimension_numbers=(((1,), (1,)), ((), ())),   # -> (1, TM)
        preferred_element_type=jnp.float32,
    )
    logits = logits + b_ref[0, 0]
    o_ref[...] = jax.nn.sigmoid(logits).astype(o_ref.dtype)


def _vmem_plan():
    """Return (vmem_limit_bytes, per_buffer_budget_bytes, small_vmem_chip)."""
    cap = None
    try:
        info = pltpu.get_tpu_info()
        cap = getattr(info, "vmem_capacity_bytes", None)
    except Exception:
        cap = None
    if cap is None:
        cap = 64 * _MiB                 # conservative: assume v7x-class VMEM
    if cap >= 128 * _MiB:               # v5e / v6e: 128 MiB physical VMEM
        return 64 * _MiB, 12 * _MiB, False
    # v7x: 64 MiB physical per TensorCore -> keep working set well under it
    return 48 * _MiB, 10 * _MiB, True


def _pick_tm(n, p, itemsize, per_buffer_budget, max_tile_rows=None):
    """Batch-tile rows: either the full array (tm == n) or a multiple of 128."""
    row_bytes = max(1, p * itemsize)
    tm = per_buffer_budget // row_bytes
    tm = min(tm, 32768)
    if max_tile_rows is not None:
        tm = min(tm, max_tile_rows)
    if tm >= n:
        return n                        # single block == full dims (always legal)
    tm = max(128, (tm // 128) * 128)    # lane-dense out stores, bf16 sublane packing
    return tm


def logistic_regression_forward(x, weight, bias, *, max_tile_rows=None, use_pallas=None):
    """sigmoid(x @ W^T + b).  x: [N, P], weight: [1, P], bias: [1] -> [N, 1]."""
    n, p = x.shape
    out_dtype = x.dtype
    itemsize = jnp.dtype(x.dtype).itemsize

    def _reference():
        logits = jnp.dot(x, weight.T, preferred_element_type=jnp.float32)
        logits = logits + jnp.asarray(bias, jnp.float32).reshape(1, 1)
        return jax.nn.sigmoid(logits).astype(out_dtype)

    # Tiny inputs: custom-call dispatch + per-step overhead dominates; XLA's fused
    # GEMV+sigmoid is already optimal there.
    if use_pallas is None:
        use_pallas = (n >= 128) and (n * p * itemsize >= 256 * 1024)
    if not use_pallas:
        return _reference()

    vmem_limit, per_buffer_budget, small_vmem = _vmem_plan()
    tm = _pick_tm(n, p, itemsize, per_buffer_budget, max_tile_rows)

    tile_bytes = tm * p * itemsize
    # Resident weight (padded to 8 sublanes, double-buffered), output buffers,
    # internal scratch headroom.
    overhead = (2 * 8 * p * itemsize
                + 3 * 8 * tm * jnp.dtype(out_dtype).itemsize
                + 2 * _MiB)
    if 2 * tile_bytes + overhead > vmem_limit:
        # Extremely wide P: even a 128-row tile would blow VMEM.
        # TODO(synk): add a feature-axis (K) grid with f32 accumulation for P >> 1e5.
        return _reference()

    grid_steps = pl.cdiv(n, tm)
    grid = (grid_steps,)

    # Triple-buffer the x stream on small-VMEM / high-HBM-BW chips (v7x) when it
    # fits and there is more than one grid step to pipeline.
    triple = small_vmem and grid_steps > 1 and (3 * tile_bytes + overhead <= vmem_limit)
    try:
        if triple:
            x_spec = pl.BlockSpec((tm, p), lambda i: (i, 0), pipeline_mode=pl.Buffered(3))
        else:
            x_spec = pl.BlockSpec((tm, p), lambda i: (i, 0))
    except TypeError:
        x_spec = pl.BlockSpec((tm, p), lambda i: (i, 0))

    b2d = jnp.asarray(bias, jnp.float32).reshape(1, 1)
    bytes_accessed = (x.size * itemsize
                      + weight.size * jnp.dtype(weight.dtype).itemsize
                      + n * jnp.dtype(out_dtype).itemsize
                      + 4)

    out_row = pl.pallas_call(
        _logreg_kernel,
        out_shape=jax.ShapeDtypeStruct((1, n), out_dtype),
        grid=grid,
        in_specs=[
            x_spec,                                                     # x tile, streamed
            pl.BlockSpec((1, p), lambda i: (0, 0)),                     # W, VMEM-resident
            pl.BlockSpec(memory_space=pltpu.MemorySpace.SMEM),          # bias scalar
        ],
        out_specs=pl.BlockSpec((1, tm), lambda i: (0, i)),              # lane-dense out
        compiler_params=pltpu.CompilerParams(
            dimension_semantics=("parallel",),
            vmem_limit_bytes=vmem_limit,
        ),
        cost_estimate=pl.CostEstimate(
            flops=2 * n * p,
            transcendentals=n,
            bytes_accessed=bytes_accessed,
        ),
    )(x, weight, b2d)

    return out_row.reshape(n, 1)


if __name__ == "__main__":
    key = jax.random.PRNGKey(0)
    kx0, kw, kb, kx1 = jax.random.split(key, 4)

    # Case 1: tiny shapes (N=8, P=32) -> fused-jnp fast path (kernel overhead skipped).
    N0, P0 = 8, 32
    x0 = jax.random.normal(kx0, (N0, P0), dtype=jnp.float32)
    w0 = jax.random.normal(kw, (1, P0), dtype=jnp.float32) * 0.1
    b0 = jax.random.normal(kb, (1,), dtype=jnp.float32) * 0.1
    out0 = jax.block_until_ready(logistic_regression_forward(x0, w0, b0))
    ref0 = jax.nn.sigmoid(x0 @ w0.T + b0)
    assert out0.shape == (N0, 1)
    assert jnp.allclose(out0, ref0, atol=1e-5, rtol=1e-5)

    # Case 2: Pallas path, single full-array block (tm == N).
    N1, P1 = 512, 256
    x1 = jax.random.normal(kx1, (N1, P1), dtype=jnp.float32)
    w1 = jax.random.normal(kw, (1, P1), dtype=jnp.float32) * 0.1
    b1 = jax.random.normal(kb, (1,), dtype=jnp.float32) * 0.1
    out1 = jax.block_until_ready(
        logistic_regression_forward(x1, w1, b1, use_pallas=True))
    ref1 = jax.nn.sigmoid(x1 @ w1.T + b1)
    assert out1.shape == (N1, 1)
    assert jnp.allclose(out1, ref1, atol=1e-4, rtol=1e-4)

    # Case 3: Pallas path with a multi-step batch grid (tm = 128, 4 grid steps).
    out2 = jax.block_until_ready(
        logistic_regression_forward(x1, w1, b1, max_tile_rows=128, use_pallas=True))
    assert out2.shape == (N1, 1)
    assert jnp.allclose(out2, ref1, atol=1e-4, rtol=1e-4)

    print("KERNEL_OK")
</pallas_src>

<mosaic_0001>
module attributes {stable_mosaic.version = 11 : i64} {
  func.func @_logreg_kernel(%arg0: i32, %arg1: memref<512x256xf32, #tpu.memory_space<vmem>>, %arg2: memref<1x256xf32, #tpu.memory_space<vmem>>, %arg3: memref<1x1xf32, #tpu.memory_space<smem>>, %arg4: memref<1x512xf32, #tpu.memory_space<vmem>>) attributes {dimension_semantics = [#tpu.dimension_semantics<parallel>], iteration_bounds = array<i64: 1>, scalar_prefetch = 0 : i64, scratch_operands = 0 : i64, tpu.core_type = #tpu.core_type<tc>, window_params = [{transform_indices = @transform_0, window_bounds = array<i64: 512, 256>}, {pipeline_mode = #tpu.pipeline_mode<synchronous>, transform_indices = @transform_1, window_bounds = array<i64: 1, 256>}, {transform_indices = @transform_2, window_bounds = array<i64: 1, 1>}, {transform_indices = @transform_3, window_bounds = array<i64: 1, 512>}]} {
    %c0 = arith.constant 0 : index
    %c0_0 = arith.constant 0 : index
    %0 = vector.load %arg2[%c0, %c0_0] : memref<1x256xf32, #tpu.memory_space<vmem>>, vector<1x256xf32>
    %c0_1 = arith.constant 0 : index
    %c0_2 = arith.constant 0 : index
    %1 = vector.load %arg1[%c0_1, %c0_2] : memref<512x256xf32, #tpu.memory_space<vmem>>, vector<512x256xf32>
    %cst = arith.constant dense<0.000000e+00> : vector<1x512xf32>
    %2 = tpu.matmul %0, %1, %cst {dimension_numbers = #tpu.dot_dimension_numbers<[1], [1], [0], [0], [0, 0, 1, 0], [], []>} : vector<1x256xf32>, vector<512x256xf32>, vector<1x512xf32> -> vector<1x512xf32>
    %c0_3 = arith.constant 0 : index
    %c0_4 = arith.constant 0 : index
    %3 = memref.load %arg3[%c0_3, %c0_4] : memref<1x1xf32, #tpu.memory_space<smem>>
    %4 = vector.broadcast %3 : f32 to vector<1x512xf32>
    %5 = arith.addf %2, %4 : vector<1x512xf32>
    %6 = arith.negf %5 : vector<1x512xf32>
    %7 = math.exp %6 : vector<1x512xf32>
    %cst_5 = arith.constant 1.000000e+00 : f32
    %8 = vector.broadcast %cst_5 : f32 to vector<1x512xf32>
    %9 = arith.addf %8, %7 : vector<1x512xf32>
    %10 = arith.divf %8, %9 : vector<1x512xf32>
    %c0_6 = arith.constant 0 : index
    %c0_7 = arith.constant 0 : index
    %11 = vector.load %arg4[%c0_6, %c0_7] : memref<1x512xf32, #tpu.memory_space<vmem>>, vector<1x512xf32>
    tpu.vector_store %arg4[%c0_6, %c0_7], %10 {strides = array<i32>} : memref<1x512xf32, #tpu.memory_space<vmem>>, vector<1x512xf32>,
    return
  }
  func.func @transform_0(%arg0: i32) -> (i32, i32) {
    %c0_i32 = arith.constant 0 : i32
    %c0_i32_0 = arith.constant 0 : i32
    return %arg0, %c0_i32 : i32, i32
  }
  func.func @transform_1(%arg0: i32) -> (i32, i32) {
    %c0_i32 = arith.constant 0 : i32
    %c0_i32_0 = arith.constant 0 : i32
    %c0_i32_1 = arith.constant 0 : i32
    return %c0_i32, %c0_i32_0 : i32, i32
  }
  func.func @transform_2(%arg0: i32) -> (i32, i32) {
    %c0_i32 = arith.constant 0 : i32
    %c0_i32_0 = arith.constant 0 : i32
    %c0_i32_1 = arith.constant 0 : i32
    return %c0_i32, %c0_i32_0 : i32, i32
  }
  func.func @transform_3(%arg0: i32) -> (i32, i32) {
    %c0_i32 = arith.constant 0 : i32
    %c0_i32_0 = arith.constant 0 : i32
    return %c0_i32, %arg0 : i32, i32
  }
}

</mosaic_0001>

<llo_original>
// kernel: tpu_custom_call.1
$region0: #{tpu_custom_call.1}
  #allocation0 [shape = 'u32[]', space=smem, size = 0x4, offset = 0x4, fixed_abs, tag = 'smem constant byte address 0x4 - core index']
  #allocation1 [shape = 'u32[144,128]{1,0:T(1,128)}', space=vmem, size = 0x12000, scoped, tag = 'internal scratch']
  #allocation2 [shape = 'f32[1,1]{1,0:T(1,128)S(6)}', space=smem, size = 0x200, scoped, tag = 'scoped memory for tpu_custom_call.1']
  %s0 = inlined_call_operand.hbm [shape: f32[512,256], index: 0, kind: input, shape index: {}]
  %s1 = inlined_call_operand.vmem [shape: f32[1,256], index: 1, kind: input, shape index: {}]
  %s2 = inlined_call_operand.<no memory space> [shape: f32[1,1], index: 2, kind: input, shape index: {}]
  %s3 = inlined_call_operand.hbm [shape: f32[1,512], index: 3, kind: output, shape index: {}]
  %s4 = sld [smem:[#allocation0]]
  $region26: #{tpu_custom_call.1} parent=0
    _
  %s6 = ssub.s32 1, %s4
  %s7 = scalar_select 0, %s6, %s4
  %8 = sst [smem:[#allocation2]] %s2
  $region1: #{tpu_custom_call.1} parent=0
    #allocation3 [shape = 'u8[524288]{0}', space=vmem, size = 0x80000, scoped, tag = 'input window, operand 0, single buffered']
    #allocation4 [shape = 's32[1]{0}', space=sflag, size = 0x4, scoped, tag = 'scoped memory for tpu_custom_call.1']
    #allocation5 [shape = 's32[1]{0}', space=sflag, size = 0x4, scoped, tag = 'scoped memory for tpu_custom_call.1']
    #allocation6 [shape = 'u8[2048]{0}', space=vmem, size = 0x800, scoped, tag = 'output window, operand 0, single buffered']
    %9 = vsyncpa [#allocation4], 0
    %10 = vsyncpa [#allocation5], 0
    // Predicated region
    $region2: #{tpu_custom_call.1} parent=1 // pred_check
      _
    $region3: #{tpu_custom_call.1} parent=1 // pred_check_branch
      %12 = sbr.rel (0) target = $region5
    $region4: #{tpu_custom_call.1} parent=1 // pred_region
      %s14 = ssub.s32 16384, 16384
      %15 = vsyncadd [#allocation4], %s14
      %s16 = sshll.u32 [#allocation3], 4
      %s17 = int_to_ptr.vmem [resolvable:$true] %s16
      %22 = dma.hbm_to_vmem [thread:$0]  %s0, 16384, %s17, [#allocation4], 256, 256, 16
    $region5: #{tpu_custom_call.1} parent=1 // pred_fallthru
      _
    // Predicated region
    $region6: #{tpu_custom_call.1} parent=1 // pred_check
      _
    $region7: #{tpu_custom_call.1} parent=1 // pred_check_branch
      %24 = sbr.rel (0) target = $region9
    $region8: #{tpu_custom_call.1} parent=1 // pred_region
      _
    $region9: #{tpu_custom_call.1} parent=1 // pred_fallthru
      _
    // Predicated region
    $region10: #{tpu_custom_call.1} parent=1 // pred_check
      _
    $region11: #{tpu_custom_call.1} parent=1 // pred_check_branch
      %26 = sbr.rel (0) target = $region13
    $region12: #{tpu_custom_call.1} parent=1 // pred_region
      _
    $region13: #{tpu_custom_call.1} parent=1 // pred_fallthru
      _
    // Predicated region
    $region14: #{tpu_custom_call.1} parent=1 // pred_check
      _
    $region15: #{tpu_custom_call.1} parent=1 // pred_check_branch
      %28 = sbr.rel (0) target = $region17
    $region16: #{tpu_custom_call.1} parent=1 // pred_region
      %29 = dma.done [#allocation4], 16384
    $region17: #{tpu_custom_call.1} parent=1 // pred_fallthru
      _
    %v30 = vld [vmem:[%s1] sm:$0x3]
    %v31 = vld [vmem:[#allocation3] sm:$0xff]
    %v32 = vld [vmem:[#allocation3 + $0x8] sm:$0xff]
    %v33 = vld [vmem:[#allocation3 + $0x10] sm:$0xff]
    %v34 = vld [vmem:[#allocation3 + $0x18] sm:$0xff]
    %v35 = vld [vmem:[#allocation3 + $0x20] sm:$0xff]
    %v36 = vld [vmem:[#allocation3 + $0x28] sm:$0xff]
    %v37 = vld [vmem:[#allocation3 + $0x30] sm:$0xff]
    %v38 = vld [vmem:[#allocation3 + $0x38] sm:$0xff]
    %v39 = vld [vmem:[#allocation3 + $0x40] sm:$0xff]
    %v40 = vld [vmem:[#allocation3 + $0x48] sm:$0xff]
    %v41 = vld [vmem:[#allocation3 + $0x50] sm:$0xff]
    %v42 = vld [vmem:[#allocation3 + $0x58] sm:$0xff]
    %v43 = vld [vmem:[#allocation3 + $0x60] sm:$0xff]
    %v44 = vld [vmem:[#allocation3 + $0x68] sm:$0xff]
    %v45 = vld [vmem:[#allocation3 + $0x70] sm:$0xff]
    %v46 = vld [vmem:[#allocation3 + $0x78] sm:$0xff]
    %v47 = vld [vmem:[#allocation3 + $0x80] sm:$0xff]
    %v48 = vld [vmem:[#allocation3 + $0x88] sm:$0xff]
    %v49 = vld [vmem:[#allocation3 + $0x90] sm:$0xff]
    %v50 = vld [vmem:[#allocation3 + $0x98] sm:$0xff]
    %v51 = vld [vmem:[#allocation3 + $0xa0] sm:$0xff]
    %v52 = vld [vmem:[#allocation3 + $0xa8] sm:$0xff]
    %v53 = vld [vmem:[#allocation3 + $0xb0] sm:$0xff]
    %v54 = vld [vmem:[#allocation3 + $0xb8] sm:$0xff]
    %v55 = vld [vmem:[#allocation3 + $0xc0] sm:$0xff]
    %v56 = vld [vmem:[#allocation3 + $0xc8] sm:$0xff]
    %v57 = vld [vmem:[#allocation3 + $0xd0] sm:$0xff]
    %v58 = vld [vmem:[#allocation3 + $0xd8] sm:$0xff]
    %v59 = vld [vmem:[#allocation3 + $0xe0] sm:$0xff]
    %v60 = vld [vmem:[#allocation3 + $0xe8] sm:$0xff]
    %v61 = vld [vmem:[#allocation3 + $0xf0] sm:$0xff]
    %v62 = vld [vmem:[#allocation3 + $0xf8] sm:$0xff]
    %v63 = vld [vmem:[#allocation3 + $0x100] sm:$0xff]
    %v64 = vld [vmem:[#allocation3 + $0x108] sm:$0xff]
    %v65 = vld [vmem:[#allocation3 + $0x110] sm:$0xff]
    %v66 = vld [vmem:[#allocation3 + $0x118] sm:$0xff]
    %v67 = vld [vmem:[#allocation3 + $0x120] sm:$0xff]
    %v68 = vld [vmem:[#allocation3 + $0x128] sm:$0xff]
    %v69 = vld [vmem:[#allocation3 + $0x130] sm:$0xff]
    %v70 = vld [vmem:[#allocation3 + $0x138] sm:$0xff]
    %v71 = vld [vmem:[#allocation3 + $0x140] sm:$0xff]
    %v72 = vld [vmem:[#allocation3 + $0x148] sm:$0xff]
    %v73 = vld [vmem:[#allocation3 + $0x150] sm:$0xff]
    %v74 = vld [vmem:[#allocation3 + $0x158] sm:$0xff]
    %v75 = vld [vmem:[#allocation3 + $0x160] sm:$0xff]
    %v76 = vld [vmem:[#allocation3 + $0x168] sm:$0xff]
    %v77 = vld [vmem:[#allocation3 + $0x170] sm:$0xff]
    %v78 = vld [vmem:[#allocation3 + $0x178] sm:$0xff]
    %v79 = vld [vmem:[#allocation3 + $0x180] sm:$0xff]
    %v80 = vld [vmem:[#allocation3 + $0x188] sm:$0xff]
    %v81 = vld [vmem:[#allocation3 + $0x190] sm:$0xff]
    %v82 = vld [vmem:[#allocation3 + $0x198] sm:$0xff]
    %v83 = vld [vmem:[#allocation3 + $0x1a0] sm:$0xff]
    %v84 = vld [vmem:[#allocation3 + $0x1a8] sm:$0xff]
    %v85 = vld [vmem:[#allocation3 + $0x1b0] sm:$0xff]
    %v86 = vld [vmem:[#allocation3 + $0x1b8] sm:$0xff]
    %v87 = vld [vmem:[#allocation3 + $0x1c0] sm:$0xff]
    %v88 = vld [vmem:[#allocation3 + $0x1c8] sm:$0xff]
    %v89 = vld [vmem:[#allocation3 + $0x1d0] sm:$0xff]
    %v90 = vld [vmem:[#allocation3 + $0x1d8] sm:$0xff]
    %v91 = vld [vmem:[#allocation3 + $0x1e0] sm:$0xff]
    %v92 = vld [vmem:[#allocation3 + $0x1e8] sm:$0xff]
    %v93 = vld [vmem:[#allocation3 + $0x1f0] sm:$0xff]
    %v94 = vld [vmem:[#allocation3 + $0x1f8] sm:$0xff]
    %v95 = vld [vmem:[#allocation3 + $0x200] sm:$0xff]
    %v96 = vld [vmem:[#allocation3 + $0x208] sm:$0xff]
    %v97 = vld [vmem:[#allocation3 + $0x210] sm:$0xff]
    %v98 = vld [vmem:[#allocation3 + $0x218] sm:$0xff]
    %v99 = vld [vmem:[#allocation3 + $0x220] sm:$0xff]
    %v100 = vld [vmem:[#allocation3 + $0x228] sm:$0xff]
    %v101 = vld [vmem:[#allocation3 + $0x230] sm:$0xff]
    %v102 = vld [vmem:[#allocation3 + $0x238] sm:$0xff]
    %v103 = vld [vmem:[#allocation3 + $0x240] sm:$0xff]
    %v104 = vld [vmem:[#allocation3 + $0x248] sm:$0xff]
    %v105 = vld [vmem:[#allocation3 + $0x250] sm:$0xff]
    %v106 = vld [vmem:[#allocation3 + $0x258] sm:$0xff]
    %v107 = vld [vmem:[#allocation3 + $0x260] sm:$0xff]
    %v108 = vld [vmem:[#allocation3 + $0x268] sm:$0xff]
    %v109 = vld [vmem:[#allocation3 + $0x270] sm:$0xff]
    %v110 = vld [vmem:[#allocation3 + $0x278] sm:$0xff]
    %v111 = vld [vmem:[#allocation3 + $0x280] sm:$0xff]
    %v112 = vld [vmem:[#allocation3 + $0x288] sm:$0xff]
    %v113 = vld [vmem:[#allocation3 + $0x290] sm:$0xff]
    %v114 = vld [vmem:[#allocation3 + $0x298] sm:$0xff]
    %v115 = vld [vmem:[#allocation3 + $0x2a0] sm:$0xff]
    %v116 = vld [vmem:[#allocation3 + $0x2a8] sm:$0xff]
    %v117 = vld [vmem:[#allocation3 + $0x2b0] sm:$0xff]
    %v118 = vld [vmem:[#allocation3 + $0x2b8] sm:$0xff]
    %v119 = vld [vmem:[#allocation3 + $0x2c0] sm:$0xff]
    %v120 = vld [vmem:[#allocation3 + $0x2c8] sm:$0xff]
    %v121 = vld [vmem:[#allocation3 + $0x2d0] sm:$0xff]
    %v122 = vld [vmem:[#allocation3 + $0x2d8] sm:$0xff]
    %v123 = vld [vmem:[#allocation3 + $0x2e0] sm:$0xff]
    %v124 = vld [vmem:[#allocation3 + $0x2e8] sm:$0xff]
    %v125 = vld [vmem:[#allocation3 + $0x2f0] sm:$0xff]
    %v126 = vld [vmem:[#allocation3 + $0x2f8] sm:$0xff]
    %v127 = vld [vmem:[#allocation3 + $0x300] sm:$0xff]
    %v128 = vld [vmem:[#allocation3 + $0x308] sm:$0xff]
    %v129 = vld [vmem:[#allocation3 + $0x310] sm:$0xff]
    %v130 = vld [vmem:[#allocation3 + $0x318] sm:$0xff]
    %v131 = vld [vmem:[#allocation3 + $0x320] sm:$0xff]
    %v132 = vld [vmem:[#allocation3 + $0x328] sm:$0xff]
    %v133 = vld [vmem:[#allocation3 + $0x330] sm:$0xff]
    %v134 = vld [vmem:[#allocation3 + $0x338] sm:$0xff]
    %v135 = vld [vmem:[#allocation3 + $0x340] sm:$0xff]
    %v136 = vld [vmem:[#allocation3 + $0x348] sm:$0xff]
    %v137 = vld [vmem:[#allocation3 + $0x350] sm:$0xff]
    %v138 = vld [vmem:[#allocation3 + $0x358] sm:$0xff]
    %v139 = vld [vmem:[#allocation3 + $0x360] sm:$0xff]
    %v140 = vld [vmem:[#allocation3 + $0x368] sm:$0xff]
    %v141 = vld [vmem:[#allocation3 + $0x370] sm:$0xff]
    %v142 = vld [vmem:[#allocation3 + $0x378] sm:$0xff]
    %v143 = vld [vmem:[#allocation3 + $0x380] sm:$0xff]
    %v144 = vld [vmem:[#allocation3 + $0x388] sm:$0xff]
    %v145 = vld [vmem:[#allocation3 + $0x390] sm:$0xff]
    %v146 = vld [vmem:[#allocation3 + $0x398] sm:$0xff]
    %v147 = vld [vmem:[#allocation3 + $0x3a0] sm:$0xff]
    %v148 = vld [vmem:[#allocation3 + $0x3a8] sm:$0xff]
    %v149 = vld [vmem:[#allocation3 + $0x3b0] sm:$0xff]
    %v150 = vld [vmem:[#allocation3 + $0x3b8] sm:$0xff]
    %v151 = vld [vmem:[#allocation3 + $0x3c0] sm:$0xff]
    %v152 = vld [vmem:[#allocation3 + $0x3c8] sm:$0xff]
    %v153 = vld [vmem:[#allocation3 + $0x3d0] sm:$0xff]
    %v154 = vld [vmem:[#allocation3 + $0x3d8] sm:$0xff]
    %v155 = vld [vmem:[#allocation3 + $0x3e0] sm:$0xff]
    %v156 = vld [vmem:[#allocation3 + $0x3e8] sm:$0xff]
    %v157 = vld [vmem:[#allocation3 + $0x3f0] sm:$0xff]
    %v158 = vld [vmem:[#allocation3 + $0x3f8] sm:$0xff]
    %s159 = sld [smem:[#allocation2]]
    %v160 = vstv %s159
    %v162 = vlaneseq
    %v163 = vshrl.u32 %v162, 7
    %v164 = vsub.s32 0, %v163
    %v165 = vrot.slane %v30, %v164
    %v166 = vlaneseq
    %v167 = vshrl.u32 %v166, 7
    %v168 = vsub.s32 1, %v167
    %v169 = vrot.slane %v30, %v168
    %172 = vmatprep.subr.mxu0 %v32
    %173 = vmatpush1.xpose.msra.mxu0 %v31
    %174 = vmatprep.subr.mxu0 %v34
    %175 = vmatpush1.xpose.msra.mxu0 %v33
    %176 = vmatprep.subr.mxu0 %v36
    %177 = vmatpush1.xpose.msra.mxu0 %v35
    %178 = vmatprep.subr.mxu0 %v38
    %179 = vmatpush1.xpose.msra.mxu0 %v37
    %180 = vmatprep.subr.mxu0 %v40
    %181 = vmatpush1.xpose.msra.mxu0 %v39
    %182 = vmatprep.subr.mxu0 %v42
    %183 = vmatpush1.xpose.msra.mxu0 %v41
    %184 = vmatprep.subr.mxu0 %v44
    %185 = vmatpush1.xpose.msra.mxu0 %v43
    %186 = vmatprep.subr.mxu0 %v46
    %187 = vmatpush1.xpose.msra.mxu0 %v45
    %188 = vmatprep.subr.mxu0 %v48
    %189 = vmatpush1.xpose.msra.mxu0 %v47
    %190 = vmatprep.subr.mxu0 %v50
    %191 = vmatpush1.xpose.msra.mxu0 %v49
    %192 = vmatprep.subr.mxu0 %v52
    %193 = vmatpush1.xpose.msra.mxu0 %v51
    %194 = vmatprep.subr.mxu0 %v54
    %195 = vmatpush1.xpose.msra.mxu0 %v53
    %196 = vmatprep.subr.mxu0 %v56
    %197 = vmatpush1.xpose.msra.mxu0 %v55
    %198 = vmatprep.subr.mxu0 %v58
    %199 = vmatpush1.xpose.msra.mxu0 %v57
    %200 = vmatprep.subr.mxu0 %v60
    %201 = vmatpush1.xpose.msra.mxu0 %v59
    %202 = vmatprep.subr.mxu0 %v62
    %203 = vmatpush1.xpose.msra.mxu0 %v61
    %204 = vmatprep.subr.mxu0 %v64
    %205 = vmatpush1.xpose.msra.mxu0 %v63
    %206 = vmatprep.subr.mxu0 %v66
    %207 = vmatpush1.xpose.msra.mxu0 %v65
    %208 = vmatprep.subr.mxu0 %v68
    %209 = vmatpush1.xpose.msra.mxu0 %v67
    %210 = vmatprep.subr.mxu0 %v70
    %211 = vmatpush1.xpose.msra.mxu0 %v69
    %212 = vmatprep.subr.mxu0 %v72
    %213 = vmatpush1.xpose.msra.mxu0 %v71
    %214 = vmatprep.subr.mxu0 %v74
    %215 = vmatpush1.xpose.msra.mxu0 %v73
    %216 = vmatprep.subr.mxu0 %v76
    %217 = vmatpush1.xpose.msra.mxu0 %v75
    %218 = vmatprep.subr.mxu0 %v78
    %219 = vmatpush1.xpose.msra.mxu0 %v77
    %220 = vmatprep.subr.mxu0 %v80
    %221 = vmatpush1.xpose.msra.mxu0 %v79
    %222 = vmatprep.subr.mxu0 %v82
    %223 = vmatpush1.xpose.msra.mxu0 %v81
    %224 = vmatprep.subr.mxu0 %v84
    %225 = vmatpush1.xpose.msra.mxu0 %v83
    %226 = vmatprep.subr.mxu0 %v86
    %227 = vmatpush1.xpose.msra.mxu0 %v85
    %228 = vmatprep.subr.mxu0 %v88
    %229 = vmatpush1.xpose.msra.mxu0 %v87
    %230 = vmatprep.subr.mxu0 %v90
    %231 = vmatpush1.xpose.msra.mxu0 %v89
    %232 = vmatprep.subr.mxu0 %v92
    %233 = vmatpush1.xpose.msra.mxu0 %v91
    %234 = vmatprep.subr.mxu0 %v94
    %235 = vmatpush1.xpose.msra.mxu0 %v93
    %236 = vmatprep.mubr.f32.mxu0 %v169
    %237 = vmatmul.mubr.f32.gmra.mrb[0].mxu0 %v165
    %v238 = vpop.f32.mrb[0].mxu0
    %v239 = vadd.f32 %v160, %v238
    %v240 = vpop.f32.mrb[0].mxu0
    %v241 = vadd.f32 %v160, %v240
    %242 = vdwg.mxu0
    %243 = vmatprep.subr.mxu0 %v96
    %244 = vmatpush1.xpose.msra.mxu0 %v95
    %245 = vmatprep.subr.mxu0 %v98
    %246 = vmatpush1.xpose.msra.mxu0 %v97
    %247 = vmatprep.subr.mxu0 %v100
    %248 = vmatpush1.xpose.msra.mxu0 %v99
    %249 = vmatprep.subr.mxu0 %v102
    %250 = vmatpush1.xpose.msra.mxu0 %v101
    %251 = vmatprep.subr.mxu0 %v104
    %252 = vmatpush1.xpose.msra.mxu0 %v103
    %253 = vmatprep.subr.mxu0 %v106
    %254 = vmatpush1.xpose.msra.mxu0 %v105
    %255 = vmatprep.subr.mxu0 %v108
    %256 = vmatpush1.xpose.msra.mxu0 %v107
    %257 = vmatprep.subr.mxu0 %v110
    %258 = vmatpush1.xpose.msra.mxu0 %v109
    %259 = vmatprep.subr.mxu0 %v112
    %260 = vmatpush1.xpose.msra.mxu0 %v111
    %261 = vmatprep.subr.mxu0 %v114
    %262 = vmatpush1.xpose.msra.mxu0 %v113
    %263 = vmatprep.subr.mxu0 %v116
    %264 = vmatpush1.xpose.msra.mxu0 %v115
    %265 = vmatprep.subr.mxu0 %v118
    %266 = vmatpush1.xpose.msra.mxu0 %v117
    %267 = vmatprep.subr.mxu0 %v120
    %268 = vmatpush1.xpose.msra.mxu0 %v119
    %269 = vmatprep.subr.mxu0 %v122
    %270 = vmatpush1.xpose.msra.mxu0 %v121
    %271 = vmatprep.subr.mxu0 %v124
    %272 = vmatpush1.xpose.msra.mxu0 %v123
    %273 = vmatprep.subr.mxu0 %v126
    %274 = vmatpush1.xpose.msra.mxu0 %v125
    %275 = vmatprep.subr.mxu0 %v128
    %276 = vmatpush1.xpose.msra.mxu0 %v127
    %277 = vmatprep.subr.mxu0 %v130
    %278 = vmatpush1.xpose.msra.mxu0 %v129
    %279 = vmatprep.subr.mxu0 %v132
    %280 = vmatpush1.xpose.msra.mxu0 %v131
    %281 = vmatprep.subr.mxu0 %v134
    %282 = vmatpush1.xpose.msra.mxu0 %v133
    %283 = vmatprep.subr.mxu0 %v136
    %284 = vmatpush1.xpose.msra.mxu0 %v135
    %285 = vmatprep.subr.mxu0 %v138
    %286 = vmatpush1.xpose.msra.mxu0 %v137
    %287 = vmatprep.subr.mxu0 %v140
    %288 = vmatpush1.xpose.msra.mxu0 %v139
    %289 = vmatprep.subr.mxu0 %v142
    %290 = vmatpush1.xpose.msra.mxu0 %v141
    %291 = vmatprep.subr.mxu0 %v144
    %292 = vmatpush1.xpose.msra.mxu0 %v143
    %293 = vmatprep.subr.mxu0 %v146
    %294 = vmatpush1.xpose.msra.mxu0 %v145
    %295 = vmatprep.subr.mxu0 %v148
    %296 = vmatpush1.xpose.msra.mxu0 %v147
    %297 = vmatprep.subr.mxu0 %v150
    %298 = vmatpush1.xpose.msra.mxu0 %v149
    %299 = vmatprep.subr.mxu0 %v152
    %300 = vmatpush1.xpose.msra.mxu0 %v151
    %301 = vmatprep.subr.mxu0 %v154
    %302 = vmatpush1.xpose.msra.mxu0 %v153
    %303 = vmatprep.subr.mxu0 %v156
    %304 = vmatpush1.xpose.msra.mxu0 %v155
    %305 = vmatprep.subr.mxu0 %v158
    %306 = vmatpush1.xpose.msra.mxu0 %v157
    %307 = vmatprep.mubr.f32.mxu0 %v169
    %308 = vmatmul.mubr.f32.gmra.mrb[0].mxu0 %v165
    %v309 = vpop.f32.mrb[0].mxu0
    %v310 = vadd.f32 %v160, %v309
    %v311 = vpop.f32.mrb[0].mxu0
    %v312 = vadd.f32 %v160, %v311
    %313 = vdwg.mxu0
    %v314 = vxor.u32 %v239, 2147483648
    %v315 = vxor.u32 %v241, 2147483648
    %v316 = vxor.u32 %v310, 2147483648
    %v317 = vxor.u32 %v312, 2147483648
    %v318 = vmul.f32 %v314, 1.442695
    %v319 = vpow.pop %v318
    %v320 = vmul.f32 %v315, 1.442695
    %v321 = vpow.pop %v320
    %v322 = vmul.f32 %v316, 1.442695
    %v323 = vpow.pop %v322
    %v324 = vmul.f32 %v317, 1.442695
    %v325 = vpow.pop %v324
    %v326 = vadd.f32 %v319, 1.0
    %v327 = vadd.f32 %v321, 1.0
    %v328 = vadd.f32 %v323, 1.0
    %v329 = vadd.f32 %v325, 1.0
    %v330 = vrcp.pop %v326
    %v331 = vmul.f32 1.0, %v330
    %v332 = vrcp.pop %v327
    %v333 = vmul.f32 1.0, %v332
    %v334 = vrcp.pop %v328
    %v335 = vmul.f32 1.0, %v334
    %v336 = vrcp.pop %v329
    %v337 = vmul.f32 1.0, %v336
    %v342 = vcombine.low %v331, %v333
    %v343 = vcombine.low %v335, %v337
    %v345 = vunpack.c.l.s4 1966171168
    %v346 = vunpack.c.0.s8 %v345
    %v347 = vlaneseq
    %v348 = vshrl.u32 %v347, 7
    %v349 = vsub.s32 %v346, %v348
    %v350 = vrot.slane %v342, %v349
    %v352 = vunpack.c.l.s4 1966171168
    %v353 = vunpack.c.0.s8 %v352
    %v354 = vlaneseq
    %v355 = vshrl.u32 %v354, 7
    %v356 = vsub.s32 %v353, %v355
    %v357 = vrot.slane %v343, %v356
    %v358 = vcombine.low %v350, %v357
    %v360 = vunpack.c.l.s4 1966171168
    %v361 = vunpack.c.0.s8 %v360
    %v362 = vlaneseq
    %v363 = vshrl.u32 %v362, 7
    %v364 = vsub.s32 %v361, %v363
    %v365 = vrot.slane %v358, %v364
    %v367 = vlaneseq
    %vm368 = vcmp.ge.s32.totalorder %v367, 0
    %vm369 = vcmp.lt.s32.totalorder %v367, 512
    %vm370 = vmand %vm368, %vm369
    %371 = vst.msk [vmem:[#allocation6] sm:$0xf] %vm370, %v365
    // Predicated region
    $region18: #{tpu_custom_call.1} parent=1 // pred_check
      _
    $region19: #{tpu_custom_call.1} parent=1 // pred_check_branch
      %373 = sbr.rel (0) target = $region21
    $region20: #{tpu_custom_call.1} parent=1 // pred_region
      %s375 = ssub.s32 64, 64
      %376 = vsyncadd [#allocation5], %s375
      %s378 = sshll.u32 [#allocation6], 4
      %s379 = int_to_ptr.vmem [resolvable:$true] %s378
      %381 = dma.vmem_to_hbm [thread:$0]  %s379, 64, %s3, [#allocation5]
    $region21: #{tpu_custom_call.1} parent=1 // pred_fallthru
      _
    // Predicated region
    $region22: #{tpu_custom_call.1} parent=1 // pred_check
      _
    $region23: #{tpu_custom_call.1} parent=1 // pred_check_branch
      %383 = sbr.rel (0) target = $region25
    $region24: #{tpu_custom_call.1} parent=1 // pred_region
      %384 = dma.done [#allocation5], 64
    $region25: #{tpu_custom_call.1} parent=1 // pred_fallthru
      _
    %385 = vsyncpa [#allocation4], 1
    %386 = vsyncpa [#allocation5], 1

</llo_original>
